<compile_context>
chip_gen: v5e
topology: v5e:2x2
jax: 0.10.0
libtpu: 0.0.40
codegen_flags: <defaults>
</compile_context>

<pallas_src>
import functools

import jax
import jax.numpy as jnp
import numpy as np
from jax.experimental import pallas as pl
from jax.experimental.pallas import tpu as pltpu

EPS = 1e-5   # torch.nn.LayerNorm default eps
SUB = 16     # sublane alignment that satisfies both f32 (8) and bf16 (16)


def _layer_norm(x, gamma, beta):
    # x: (TT, D); gamma/beta: (1, D)
    mean = jnp.mean(x, axis=-1, keepdims=True)
    var = jnp.mean((x - mean) ** 2, axis=-1, keepdims=True)
    return (x - mean) * jax.lax.rsqrt(var + EPS) * gamma + beta


def conv_module_kernel(
    x_ref,                    # (1, TT, D) io_dtype
    g1_ref, b1_ref,           # (1, D) f32          LayerNorm 1
    wglu_ref, bglu_ref,       # (D, 2D) bf16, (1, 2D) f32   bottleneck (value|gate)
    wdw_ref, bdw_ref,         # (K, D) f32, (1, D) f32      depthwise conv
    g2_ref, b2_ref,           # (1, D) f32          LayerNorm 2 (after_conv)
    wlin_ref, blin_ref,       # (D, D) bf16, (1, D) f32     after_conv Linear
    o_ref,                    # (1, TT, D) io_dtype
    work_ref,                 # (P + TT + right, D) f32 scratch (carry|tile|rpad)
    *,
    kernel_size, dilation, padding, right, fuse_residual,
):
    t = pl.program_id(1)
    TT = x_ref.shape[1]
    D = x_ref.shape[2]
    P = padding

    # Carried left halo: zero it at the start of every sequence (t == 0).
    if P > 0:
        @pl.when(t == 0)
        def _zero_carry():
            work_ref[pl.ds(0, P), :] = jnp.zeros((P, D), jnp.float32)

    # Right zero padding of the conv input.  right > 0 only in the non-causal
    # fallback, where the whole sequence fits in a single exact-T tile.
    if right > 0:
        work_ref[pl.ds(P + TT, right), :] = jnp.zeros((right, D), jnp.float32)

    x = x_ref[0].astype(jnp.float32)                        # (TT, D) f32

    # 1) LayerNorm over the embedding dim (f32).
    out = _layer_norm(x, g1_ref[...], b1_ref[...])

    # 2) Bottleneck pointwise Conv1d(D -> 2D) + GLU as ONE (TT,D)x(D,2D) bf16
    #    matmul with f32 accumulation; value/gate split is a lane slice at D
    #    (vreg-aligned when D % 128 == 0).
    p2 = jnp.dot(out.astype(wglu_ref.dtype), wglu_ref[...],
                 preferred_element_type=jnp.float32) + bglu_ref[...]
    a = p2[:, :D]
    g = p2[:, D:]
    glu = a * jax.nn.sigmoid(g)                             # (TT, D) f32

    # 3) Depthwise (causal) Conv1d along T via the padded scratch:
    #      work = [carry (P rows) | glu (TT rows) | zeros (right rows)]
    #      y[i, d] = sum_j work[i + j*dilation, d] * wdw[j, d]
    #    TODO(synk): roll/XLU-based shifted taps would avoid the store->reload.
    work_ref[pl.ds(P, TT), :] = glu
    wdw = wdw_ref[...]                                      # (K, D)
    acc = work_ref[pl.ds(0, TT), :] * wdw[0:1, :] + bdw_ref[...]
    for j in range(1, kernel_size):
        acc = acc + work_ref[pl.ds(j * dilation, TT), :] * wdw[j:j + 1, :]

    if P > 0:
        # Save the carry: last P GLU rows become the next tile's left halo.
        work_ref[pl.ds(0, P), :] = glu[TT - P:, :]

    # 4) after_conv: LayerNorm -> Swish -> Linear (bf16 matmul, f32 accumulate).
    out = _layer_norm(acc, g2_ref[...], b2_ref[...])
    out = out * jax.nn.sigmoid(out)
    out = jnp.dot(out.astype(wlin_ref.dtype), wlin_ref[...],
                  preferred_element_type=jnp.float32) + blin_ref[...]
    # Dropout(p=0.0) == identity at inference.

    # 5) Optional fused ConformerDecoderLayer residual: x + conv_module(x).
    if fuse_residual:
        out = out + x

    o_ref[0] = out.astype(o_ref.dtype)


def convolution_module(x, params, *, kernel_size=3, dilation=1, causal=True,
                       tile_t=512, io_dtype=None, mm_dtype=jnp.bfloat16,
                       fuse_residual=True):
    """Returns conv_module(x) (+ x if fuse_residual).  x: (B, T, D)."""
    B, T, D = x.shape
    if io_dtype is None:
        io_dtype = x.dtype
    x = x.astype(io_dtype)

    if causal:
        padding = (kernel_size - 1) * 2 ** (dilation - 1)
    else:
        padding = (kernel_size - 1) * 2 ** (dilation - 1) // 2
    # Future context needed by each output frame (0 for causal).
    right = max((kernel_size - 1) * dilation - padding, 0)

    # ---- Tile selection -------------------------------------------------
    if tile_t is None:
        tile_t = T
    if causal and right == 0:
        # Tiled causal path with a carried P-row GLU halo.  Padded tail rows
        # (t_pad > T) are never read by valid (past-only) outputs and are
        # sliced off before returning.
        tile_t = max(SUB, min(tile_t, T))
        tile_t = ((tile_t + SUB - 1) // SUB) * SUB
        if tile_t < padding:                     # carry must fit in one tile
            tile_t = ((T + SUB - 1) // SUB) * SUB
        t_pad = ((T + tile_t - 1) // tile_t) * tile_t
    else:
        # Non-causal fallback: one exact-T tile so the zero right-context rows
        # in scratch are correct.  TODO(synk): real halo tiling (bounded VMEM).
        tile_t = T
        t_pad = T
    nt = t_pad // tile_t

    x_in = x if t_pad == T else jnp.pad(x, ((0, 0), (0, t_pad - T), (0, 0)))

    # ---- Weight prep: fuse the GLU halves; pre-cast matmul weights -------
    w_glu = jnp.concatenate([params["wa"], params["wg"]], axis=1).astype(mm_dtype)
    b_glu = jnp.concatenate([params["ba"], params["bg"]], axis=1)     # (1, 2D) f32
    wlin = params["wlin"].astype(mm_dtype)

    kernel = functools.partial(
        conv_module_kernel,
        kernel_size=kernel_size, dilation=dilation,
        padding=padding, right=right, fuse_residual=fuse_residual,
    )

    # Grid-invariant weights: constant index_map => DMA'd once, never refetched.
    w_spec = lambda shape: pl.BlockSpec(shape, lambda b, t: (0, 0))
    in_specs = [
        pl.BlockSpec((1, tile_t, D), lambda b, t: (b, t, 0)),   # x tile
        w_spec((1, D)), w_spec((1, D)),                         # LN1 gamma/beta
        w_spec((D, 2 * D)), w_spec((1, 2 * D)),                 # fused GLU w/b
        w_spec((kernel_size, D)), w_spec((1, D)),               # wdw, bdw
        w_spec((1, D)), w_spec((1, D)),                         # LN2 gamma/beta
        w_spec((D, D)), w_spec((1, D)),                         # wlin, blin
    ]
    out_spec = pl.BlockSpec((1, tile_t, D), lambda b, t: (b, t, 0))

    io_bytes = jnp.dtype(io_dtype).itemsize
    mm_bytes = jnp.dtype(mm_dtype).itemsize

    # ---- VMEM limit from actual buffer sizes (v7x-safe: <= 64 MiB/TC) ----
    blk = tile_t * D
    buffer_bytes = (
        2 * blk * io_bytes * 2                      # x + out blocks, double-buffered
        + 2 * (3 * D * D * mm_bytes)                # w_glu + wlin, double-buffered
        + 2 * ((kernel_size + 8) * D * 4)           # small f32 vectors
        + (padding + tile_t + right) * D * 4        # work_ref scratch
    )
    vmem_limit = int(min(64 * 1024 * 1024,
                         max(3 * buffer_bytes + (4 << 20), 16 << 20)))

    flops = int(B * t_pad * (6 * D * D + 2 * kernel_size * D + 20 * D))
    transcendentals = int(B * t_pad * (2 * D + 2))
    bytes_accessed = int(2 * B * t_pad * D * io_bytes
                         + 3 * D * D * mm_bytes
                         + (kernel_size + 9) * D * 4)
    cost = pl.CostEstimate(flops=flops, transcendentals=transcendentals,
                           bytes_accessed=bytes_accessed)

    out = pl.pallas_call(
        kernel,
        out_shape=jax.ShapeDtypeStruct((B, t_pad, D), io_dtype),
        grid_spec=pltpu.PrefetchScalarGridSpec(
            num_scalar_prefetch=0,
            grid=(B, nt),
            in_specs=in_specs,
            out_specs=out_spec,
            scratch_shapes=[pltpu.VMEM((padding + tile_t + right, D),
                                       jnp.float32)],
        ),
        compiler_params=pltpu.CompilerParams(
            # B is parallel (megacore / v7x 2-TC sharding).  T MUST remain
            # sequential ("arbitrary") because of the carried conv halo in
            # work_ref -- do not change this to "parallel" or reorder the grid.
            dimension_semantics=("parallel", "arbitrary"),
            vmem_limit_bytes=vmem_limit,
        ),
        cost_estimate=cost,
    )(
        x_in,
        params["g1"], params["b1"],
        w_glu, b_glu,
        params["wdw"], params["bdw"],
        params["g2"], params["b2"],
        wlin, params["blin"],
    )
    return out if t_pad == T else out[:, :T, :]


def reference_forward(x, p, *, kernel_size=3, dilation=1, causal=True,
                      mm_dtype=jnp.bfloat16):
    """Pure-JAX reference mirroring the PyTorch forward (same matmul precision)."""
    B, T, D = x.shape
    if causal:
        padding = (kernel_size - 1) * 2 ** (dilation - 1)
    else:
        padding = (kernel_size - 1) * 2 ** (dilation - 1) // 2

    def ln(v, g, b):
        m = v.mean(-1, keepdims=True)
        var = ((v - m) ** 2).mean(-1, keepdims=True)
        return (v - m) / jnp.sqrt(var + EPS) * g + b

    def mm(u, w):
        return jnp.dot(u.astype(mm_dtype), w.astype(mm_dtype),
                       preferred_element_type=jnp.float32)

    out = ln(x, p["g1"], p["b1"])
    a = mm(out, p["wa"]) + p["ba"]
    g = mm(out, p["wg"]) + p["bg"]
    out = a * jax.nn.sigmoid(g)                      # GLU

    # Depthwise conv: y[t] = sum_j u[t - padding + j*dilation] * w[j] (zero OOB)
    up = jnp.pad(out, ((0, 0), (padding, padding), (0, 0)))
    out = sum(up[:, j * dilation: j * dilation + T, :] * p["wdw"][j][None, None, :]
              for j in range(kernel_size)) + p["bdw"]

    out = ln(out, p["g2"], p["b2"])
    out = out * jax.nn.sigmoid(out)                  # Swish
    out = mm(out, p["wlin"]) + p["blin"]
    return out


def init_params(key, D, kernel_size):
    ks = jax.random.split(key, 10)
    s = 0.1
    f32 = jnp.float32
    return {
        "g1": jnp.ones((1, D), f32),
        "b1": jnp.zeros((1, D), f32),
        "wa": s * jax.random.normal(ks[0], (D, D), f32),
        "ba": s * jax.random.normal(ks[1], (1, D), f32),
        "wg": s * jax.random.normal(ks[2], (D, D), f32),
        "bg": s * jax.random.normal(ks[3], (1, D), f32),
        "wdw": s * jax.random.normal(ks[4], (kernel_size, D), f32),
        "bdw": s * jax.random.normal(ks[5], (1, D), f32),
        "g2": 1.0 + s * jax.random.normal(ks[6], (1, D), f32),
        "b2": s * jax.random.normal(ks[7], (1, D), f32),
        "wlin": s * jax.random.normal(ks[8], (D, D), f32),
        "blin": s * jax.random.normal(ks[9], (1, D), f32),
    }


if __name__ == "__main__":
    B, T, D = 2, 60, 128
    kernel_size = 3

    key = jax.random.PRNGKey(0)
    kx, kp = jax.random.split(key)
    x = jax.random.normal(kx, (B, T, D), jnp.float32)
    params = init_params(kp, D, kernel_size)

    # 1) Causal (ConformerDecoder default), f32 I/O, fused residual.
    #    tile_t=16 is deliberately tiny ONLY to exercise the carried-halo
    #    tiling at this small T; production default is tile_t=512.
    out_c = convolution_module(x, params, kernel_size=kernel_size, causal=True,
                               tile_t=16, fuse_residual=True)
    out_c = jax.block_until_ready(out_c)
    ref_c = reference_forward(x, params, kernel_size=kernel_size, causal=True) + x
    np.testing.assert_allclose(np.asarray(out_c), np.asarray(ref_c),
                               atol=2e-3, rtol=2e-3)

    # 2) Causal, bf16 activation I/O, default (large) tile, fused residual.
    out_b = convolution_module(x, params, kernel_size=kernel_size, causal=True,
                               io_dtype=jnp.bfloat16, fuse_residual=True)
    out_b = jax.block_until_ready(out_b)
    xq = x.astype(jnp.bfloat16).astype(jnp.float32)
    ref_b = reference_forward(xq, params, kernel_size=kernel_size, causal=True) + xq
    np.testing.assert_allclose(np.asarray(out_b.astype(jnp.float32)),
                               np.asarray(ref_b), atol=5e-2, rtol=5e-2)

    # 3) Non-causal fallback path (single exact-T tile, right zero pad in
    #    scratch), no residual fusion.
    out_nc = convolution_module(x, params, kernel_size=kernel_size, causal=False,
                                fuse_residual=False)
    out_nc = jax.block_until_ready(out_nc)
    ref_nc = reference_forward(x, params, kernel_size=kernel_size, causal=False)
    np.testing.assert_allclose(np.asarray(out_nc), np.asarray(ref_nc),
                               atol=2e-3, rtol=2e-3)

    print("KERNEL_OK")
</pallas_src>

<mosaic_0001>
module attributes {stable_mosaic.version = 11 : i64} {
  func.func @conv_module_kernel(%arg0: i32, %arg1: i32, %arg2: memref<1x16x128xf32, #tpu.memory_space<vmem>>, %arg3: memref<1x128xf32, #tpu.memory_space<vmem>>, %arg4: memref<1x128xf32, #tpu.memory_space<vmem>>, %arg5: memref<128x256xbf16, #tpu.memory_space<vmem>>, %arg6: memref<1x256xf32, #tpu.memory_space<vmem>>, %arg7: memref<3x128xf32, #tpu.memory_space<vmem>>, %arg8: memref<1x128xf32, #tpu.memory_space<vmem>>, %arg9: memref<1x128xf32, #tpu.memory_space<vmem>>, %arg10: memref<1x128xf32, #tpu.memory_space<vmem>>, %arg11: memref<128x128xbf16, #tpu.memory_space<vmem>>, %arg12: memref<1x128xf32, #tpu.memory_space<vmem>>, %arg13: memref<1x16x128xf32, #tpu.memory_space<vmem>>, %arg14: memref<18x128xf32, #tpu.memory_space<vmem>>) attributes {dimension_semantics = [#tpu.dimension_semantics<parallel>, #tpu.dimension_semantics<arbitrary>], iteration_bounds = array<i64: 2, 4>, scalar_prefetch = 0 : i64, scratch_operands = 1 : i64, tpu.core_type = #tpu.core_type<tc>, window_params = [{transform_indices = @transform_0, window_bounds = array<i64: 1, 16, 128>}, {pipeline_mode = #tpu.pipeline_mode<synchronous>, transform_indices = @transform_1, window_bounds = array<i64: 1, 128>}, {pipeline_mode = #tpu.pipeline_mode<synchronous>, transform_indices = @transform_2, window_bounds = array<i64: 1, 128>}, {pipeline_mode = #tpu.pipeline_mode<synchronous>, transform_indices = @transform_3, window_bounds = array<i64: 128, 256>}, {pipeline_mode = #tpu.pipeline_mode<synchronous>, transform_indices = @transform_4, window_bounds = array<i64: 1, 256>}, {pipeline_mode = #tpu.pipeline_mode<synchronous>, transform_indices = @transform_5, window_bounds = array<i64: 3, 128>}, {pipeline_mode = #tpu.pipeline_mode<synchronous>, transform_indices = @transform_6, window_bounds = array<i64: 1, 128>}, {pipeline_mode = #tpu.pipeline_mode<synchronous>, transform_indices = @transform_7, window_bounds = array<i64: 1, 128>}, {pipeline_mode = #tpu.pipeline_mode<synchronous>, transform_indices = @transform_8, window_bounds = array<i64: 1, 128>}, {pipeline_mode = #tpu.pipeline_mode<synchronous>, transform_indices = @transform_9, window_bounds = array<i64: 128, 128>}, {pipeline_mode = #tpu.pipeline_mode<synchronous>, transform_indices = @transform_10, window_bounds = array<i64: 1, 128>}, {transform_indices = @transform_11, window_bounds = array<i64: 1, 16, 128>}]} {
    %c0_i32 = arith.constant 0 : i32
    %0 = arith.cmpi eq, %arg1, %c0_i32 : i32
    %1 = arith.extui %0 : i1 to i32
    %c0_i32_0 = arith.constant 0 : i32
    %2 = arith.cmpi ne, %1, %c0_i32_0 : i32
    scf.if %2 {
      %cst_47 = arith.constant 0.000000e+00 : f32
      %104 = vector.broadcast %cst_47 : f32 to vector<2x128xf32>
      %c0_48 = arith.constant 0 : index
      %c0_49 = arith.constant 0 : index
      %105 = vector.load %arg14[%c0_48, %c0_49] : memref<18x128xf32, #tpu.memory_space<vmem>>, vector<2x128xf32>
      tpu.vector_store %arg14[%c0_48, %c0_49], %104 {strides = array<i32>} : memref<18x128xf32, #tpu.memory_space<vmem>>, vector<2x128xf32>,
    } else {
    }
    %c0 = arith.constant 0 : index
    %c0_1 = arith.constant 0 : index
    %c0_2 = arith.constant 0 : index
    %3 = vector.load %arg2[%c0, %c0_1, %c0_2] : memref<1x16x128xf32, #tpu.memory_space<vmem>>, vector<1x16x128xf32>
    %4 = vector.shape_cast %3 : vector<1x16x128xf32> to vector<16x128xf32>
    %c0_3 = arith.constant 0 : index
    %c0_4 = arith.constant 0 : index
    %5 = vector.load %arg3[%c0_3, %c0_4] : memref<1x128xf32, #tpu.memory_space<vmem>>, vector<1x128xf32>
    %c0_5 = arith.constant 0 : index
    %c0_6 = arith.constant 0 : index
    %6 = vector.load %arg4[%c0_5, %c0_6] : memref<1x128xf32, #tpu.memory_space<vmem>>, vector<1x128xf32>
    %cst = arith.constant dense<0.000000e+00> : vector<16xf32>
    %7 = vector.multi_reduction <add>, %4, %cst [1] : vector<16x128xf32> to vector<16xf32>
    %8 = vector.shape_cast %7 : vector<16xf32> to vector<16x1xf32>
    %cst_7 = arith.constant 1.280000e+02 : f32
    %9 = vector.broadcast %cst_7 : f32 to vector<16x1xf32>
    %10 = arith.divf %8, %9 : vector<16x1xf32>
    %11 = vector.broadcast %10 : vector<16x1xf32> to vector<16x128xf32>
    %12 = arith.subf %4, %11 : vector<16x128xf32>
    %13 = arith.mulf %12, %12 : vector<16x128xf32>
    %cst_8 = arith.constant dense<0.000000e+00> : vector<16xf32>
    %14 = vector.multi_reduction <add>, %13, %cst_8 [1] : vector<16x128xf32> to vector<16xf32>
    %15 = vector.shape_cast %14 : vector<16xf32> to vector<16x1xf32>
    %cst_9 = arith.constant 1.280000e+02 : f32
    %16 = vector.broadcast %cst_9 : f32 to vector<16x1xf32>
    %17 = arith.divf %15, %16 : vector<16x1xf32>
    %18 = vector.broadcast %10 : vector<16x1xf32> to vector<16x128xf32>
    %19 = arith.subf %4, %18 : vector<16x128xf32>
    %cst_10 = arith.constant 9.99999974E-6 : f32
    %20 = vector.broadcast %cst_10 : f32 to vector<16x1xf32>
    %21 = arith.addf %17, %20 : vector<16x1xf32>
    %22 = math.rsqrt %21 : vector<16x1xf32>
    %23 = vector.broadcast %22 : vector<16x1xf32> to vector<16x128xf32>
    %24 = arith.mulf %19, %23 : vector<16x128xf32>
    %25 = vector.broadcast %5 : vector<1x128xf32> to vector<16x128xf32>
    %26 = arith.mulf %24, %25 : vector<16x128xf32>
    %27 = vector.broadcast %6 : vector<1x128xf32> to vector<16x128xf32>
    %28 = arith.addf %26, %27 : vector<16x128xf32>
    %29 = arith.truncf %28 : vector<16x128xf32> to vector<16x128xbf16>
    %c0_11 = arith.constant 0 : index
    %c0_12 = arith.constant 0 : index
    %30 = vector.load %arg5[%c0_11, %c0_12] : memref<128x256xbf16, #tpu.memory_space<vmem>>, vector<128x256xbf16>
    %cst_13 = arith.constant dense<0.000000e+00> : vector<16x256xf32>
    %31 = tpu.matmul %29, %30, %cst_13 {dimension_numbers = #tpu.dot_dimension_numbers<[1], [0], [0], [1], [0, 0, 1, 1], [], []>} : vector<16x128xbf16>, vector<128x256xbf16>, vector<16x256xf32> -> vector<16x256xf32>
    %c0_14 = arith.constant 0 : index
    %c0_15 = arith.constant 0 : index
    %32 = vector.load %arg6[%c0_14, %c0_15] : memref<1x256xf32, #tpu.memory_space<vmem>>, vector<1x256xf32>
    %33 = vector.broadcast %32 : vector<1x256xf32> to vector<16x256xf32>
    %34 = arith.addf %31, %33 : vector<16x256xf32>
    %35 = vector.extract_strided_slice %34 {offsets = [0, 0], sizes = [16, 128], strides = [1, 1]} : vector<16x256xf32> to vector<16x128xf32>
    %36 = vector.extract_strided_slice %34 {offsets = [0, 128], sizes = [16, 128], strides = [1, 1]} : vector<16x256xf32> to vector<16x128xf32>
    %37 = arith.negf %36 : vector<16x128xf32>
    %38 = math.exp %37 : vector<16x128xf32>
    %cst_16 = arith.constant 1.000000e+00 : f32
    %39 = vector.broadcast %cst_16 : f32 to vector<16x128xf32>
    %40 = arith.addf %39, %38 : vector<16x128xf32>
    %41 = arith.divf %39, %40 : vector<16x128xf32>
    %42 = arith.mulf %35, %41 : vector<16x128xf32>
    %c2 = arith.constant 2 : index
    %c0_17 = arith.constant 0 : index
    %43 = vector.load %arg14[%c2, %c0_17] : memref<18x128xf32, #tpu.memory_space<vmem>>, vector<16x128xf32>
    tpu.vector_store %arg14[%c2, %c0_17], %42 {strides = array<i32>} : memref<18x128xf32, #tpu.memory_space<vmem>>, vector<16x128xf32>,
    %c0_18 = arith.constant 0 : index
    %c0_19 = arith.constant 0 : index
    %44 = vector.load %arg7[%c0_18, %c0_19] : memref<3x128xf32, #tpu.memory_space<vmem>>, vector<3x128xf32>
    %c0_20 = arith.constant 0 : index
    %c0_21 = arith.constant 0 : index
    %45 = vector.load %arg14[%c0_20, %c0_21] : memref<18x128xf32, #tpu.memory_space<vmem>>, vector<16x128xf32>
    %46 = vector.extract_strided_slice %44 {offsets = [0, 0], sizes = [1, 128], strides = [1, 1]} : vector<3x128xf32> to vector<1x128xf32>
    %47 = vector.broadcast %46 : vector<1x128xf32> to vector<16x128xf32>
    %48 = arith.mulf %45, %47 : vector<16x128xf32>
    %c0_22 = arith.constant 0 : index
    %c0_23 = arith.constant 0 : index
    %49 = vector.load %arg8[%c0_22, %c0_23] : memref<1x128xf32, #tpu.memory_space<vmem>>, vector<1x128xf32>
    %50 = vector.broadcast %49 : vector<1x128xf32> to vector<16x128xf32>
    %51 = arith.addf %48, %50 : vector<16x128xf32>
    %c1 = arith.constant 1 : index
    %c0_24 = arith.constant 0 : index
    %52 = vector.load %arg14[%c1, %c0_24] : memref<18x128xf32, #tpu.memory_space<vmem>>, vector<16x128xf32>
    %53 = vector.extract_strided_slice %44 {offsets = [1, 0], sizes = [1, 128], strides = [1, 1]} : vector<3x128xf32> to vector<1x128xf32>
    %54 = vector.broadcast %53 : vector<1x128xf32> to vector<16x128xf32>
    %55 = arith.mulf %52, %54 : vector<16x128xf32>
    %56 = arith.addf %51, %55 : vector<16x128xf32>
    %c2_25 = arith.constant 2 : index
    %c0_26 = arith.constant 0 : index
    %57 = vector.load %arg14[%c2_25, %c0_26] : memref<18x128xf32, #tpu.memory_space<vmem>>, vector<16x128xf32>
    %58 = vector.extract_strided_slice %44 {offsets = [2, 0], sizes = [1, 128], strides = [1, 1]} : vector<3x128xf32> to vector<1x128xf32>
    %59 = vector.broadcast %58 : vector<1x128xf32> to vector<16x128xf32>
    %60 = arith.mulf %57, %59 : vector<16x128xf32>
    %61 = arith.addf %56, %60 : vector<16x128xf32>
    %62 = vector.extract_strided_slice %42 {offsets = [14, 0], sizes = [2, 128], strides = [1, 1]} : vector<16x128xf32> to vector<2x128xf32>
    %c0_27 = arith.constant 0 : index
    %c0_28 = arith.constant 0 : index
    %63 = vector.load %arg14[%c0_27, %c0_28] : memref<18x128xf32, #tpu.memory_space<vmem>>, vector<2x128xf32>
    tpu.vector_store %arg14[%c0_27, %c0_28], %62 {strides = array<i32>} : memref<18x128xf32, #tpu.memory_space<vmem>>, vector<2x128xf32>,
    %c0_29 = arith.constant 0 : index
    %c0_30 = arith.constant 0 : index
    %64 = vector.load %arg9[%c0_29, %c0_30] : memref<1x128xf32, #tpu.memory_space<vmem>>, vector<1x128xf32>
    %c0_31 = arith.constant 0 : index
    %c0_32 = arith.constant 0 : index
    %65 = vector.load %arg10[%c0_31, %c0_32] : memref<1x128xf32, #tpu.memory_space<vmem>>, vector<1x128xf32>
    %cst_33 = arith.constant dense<0.000000e+00> : vector<16xf32>
    %66 = vector.multi_reduction <add>, %61, %cst_33 [1] : vector<16x128xf32> to vector<16xf32>
    %67 = vector.shape_cast %66 : vector<16xf32> to vector<16x1xf32>
    %cst_34 = arith.constant 1.280000e+02 : f32
    %68 = vector.broadcast %cst_34 : f32 to vector<16x1xf32>
    %69 = arith.divf %67, %68 : vector<16x1xf32>
    %70 = vector.broadcast %69 : vector<16x1xf32> to vector<16x128xf32>
    %71 = arith.subf %61, %70 : vector<16x128xf32>
    %72 = arith.mulf %71, %71 : vector<16x128xf32>
    %cst_35 = arith.constant dense<0.000000e+00> : vector<16xf32>
    %73 = vector.multi_reduction <add>, %72, %cst_35 [1] : vector<16x128xf32> to vector<16xf32>
    %74 = vector.shape_cast %73 : vector<16xf32> to vector<16x1xf32>
    %cst_36 = arith.constant 1.280000e+02 : f32
    %75 = vector.broadcast %cst_36 : f32 to vector<16x1xf32>
    %76 = arith.divf %74, %75 : vector<16x1xf32>
    %77 = vector.broadcast %69 : vector<16x1xf32> to vector<16x128xf32>
    %78 = arith.subf %61, %77 : vector<16x128xf32>
    %cst_37 = arith.constant 9.99999974E-6 : f32
    %79 = vector.broadcast %cst_37 : f32 to vector<16x1xf32>
    %80 = arith.addf %76, %79 : vector<16x1xf32>
    %81 = math.rsqrt %80 : vector<16x1xf32>
    %82 = vector.broadcast %81 : vector<16x1xf32> to vector<16x128xf32>
    %83 = arith.mulf %78, %82 : vector<16x128xf32>
    %84 = vector.broadcast %64 : vector<1x128xf32> to vector<16x128xf32>
    %85 = arith.mulf %83, %84 : vector<16x128xf32>
    %86 = vector.broadcast %65 : vector<1x128xf32> to vector<16x128xf32>
    %87 = arith.addf %85, %86 : vector<16x128xf32>
    %88 = arith.negf %87 : vector<16x128xf32>
    %89 = math.exp %88 : vector<16x128xf32>
    %cst_38 = arith.constant 1.000000e+00 : f32
    %90 = vector.broadcast %cst_38 : f32 to vector<16x128xf32>
    %91 = arith.addf %90, %89 : vector<16x128xf32>
    %92 = arith.divf %90, %91 : vector<16x128xf32>
    %93 = arith.mulf %87, %92 : vector<16x128xf32>
    %94 = arith.truncf %93 : vector<16x128xf32> to vector<16x128xbf16>
    %c0_39 = arith.constant 0 : index
    %c0_40 = arith.constant 0 : index
    %95 = vector.load %arg11[%c0_39, %c0_40] : memref<128x128xbf16, #tpu.memory_space<vmem>>, vector<128x128xbf16>
    %cst_41 = arith.constant dense<0.000000e+00> : vector<16x128xf32>
    %96 = tpu.matmul %94, %95, %cst_41 {dimension_numbers = #tpu.dot_dimension_numbers<[1], [0], [0], [1], [0, 0, 1, 1], [], []>} : vector<16x128xbf16>, vector<128x128xbf16>, vector<16x128xf32> -> vector<16x128xf32>
    %c0_42 = arith.constant 0 : index
    %c0_43 = arith.constant 0 : index
    %97 = vector.load %arg12[%c0_42, %c0_43] : memref<1x128xf32, #tpu.memory_space<vmem>>, vector<1x128xf32>
    %98 = vector.broadcast %97 : vector<1x128xf32> to vector<16x128xf32>
    %99 = arith.addf %96, %98 : vector<16x128xf32>
    %100 = arith.addf %99, %4 : vector<16x128xf32>
    %c0_44 = arith.constant 0 : index
    %c0_45 = arith.constant 0 : index
    %c0_46 = arith.constant 0 : index
    %101 = vector.load %arg13[%c0_44, %c0_45, %c0_46] : memref<1x16x128xf32, #tpu.memory_space<vmem>>, vector<1x16x128xf32>
    %102 = vector.shape_cast %101 : vector<1x16x128xf32> to vector<16x128xf32>
    %103 = vector.shape_cast %100 : vector<16x128xf32> to vector<1x16x128xf32>
    tpu.vector_store %arg13[%c0_44, %c0_45, %c0_46], %103 {strides = array<i32>} : memref<1x16x128xf32, #tpu.memory_space<vmem>>, vector<1x16x128xf32>,
    return
  }
  func.func @transform_0(%arg0: i32, %arg1: i32) -> (i32, i32, i32) {
    %c0_i32 = arith.constant 0 : i32
    %c0_i32_0 = arith.constant 0 : i32
    return %arg0, %arg1, %c0_i32 : i32, i32, i32
  }
  func.func @transform_1(%arg0: i32, %arg1: i32) -> (i32, i32) {
    %c0_i32 = arith.constant 0 : i32
    %c0_i32_0 = arith.constant 0 : i32
    %c0_i32_1 = arith.constant 0 : i32
    return %c0_i32, %c0_i32_0 : i32, i32
  }
  func.func @transform_2(%arg0: i32, %arg1: i32) -> (i32, i32) {
    %c0_i32 = arith.constant 0 : i32
    %c0_i32_0 = arith.constant 0 : i32
    %c0_i32_1 = arith.constant 0 : i32
    return %c0_i32, %c0_i32_0 : i32, i32
  }
  func.func @transform_3(%arg0: i32, %arg1: i32) -> (i32, i32) {
    %c0_i32 = arith.constant 0 : i32
    %c0_i32_0 = arith.constant 0 : i32
    %c0_i32_1 = arith.constant 0 : i32
    return %c0_i32, %c0_i32_0 : i32, i32
  }
  func.func @transform_4(%arg0: i32, %arg1: i32) -> (i32, i32) {
    %c0_i32 = arith.constant 0 : i32
    %c0_i32_0 = arith.constant 0 : i32
    %c0_i32_1 = arith.constant 0 : i32
    return %c0_i32, %c0_i32_0 : i32, i32
  }
  func.func @transform_5(%arg0: i32, %arg1: i32) -> (i32, i32) {
    %c0_i32 = arith.constant 0 : i32
    %c0_i32_0 = arith.constant 0 : i32
    %c0_i32_1 = arith.constant 0 : i32
    return %c0_i32, %c0_i32_0 : i32, i32
  }
  func.func @transform_6(%arg0: i32, %arg1: i32) -> (i32, i32) {
    %c0_i32 = arith.constant 0 : i32
    %c0_i32_0 = arith.constant 0 : i32
    %c0_i32_1 = arith.constant 0 : i32
    return %c0_i32, %c0_i32_0 : i32, i32
  }
  func.func @transform_7(%arg0: i32, %arg1: i32) -> (i32, i32) {
    %c0_i32 = arith.constant 0 : i32
    %c0_i32_0 = arith.constant 0 : i32
    %c0_i32_1 = arith.constant 0 : i32
    return %c0_i32, %c0_i32_0 : i32, i32
  }
  func.func @transform_8(%arg0: i32, %arg1: i32) -> (i32, i32) {
    %c0_i32 = arith.constant 0 : i32
    %c0_i32_0 = arith.constant 0 : i32
    %c0_i32_1 = arith.constant 0 : i32
    return %c0_i32, %c0_i32_0 : i32, i32
  }
  func.func @transform_9(%arg0: i32, %arg1: i32) -> (i32, i32) {
    %c0_i32 = arith.constant 0 : i32
    %c0_i32_0 = arith.constant 0 : i32
    %c0_i32_1 = arith.constant 0 : i32
    return %c0_i32, %c0_i32_0 : i32, i32
  }
  func.func @transform_10(%arg0: i32, %arg1: i32) -> (i32, i32) {
    %c0_i32 = arith.constant 0 : i32
    %c0_i32_0 = arith.constant 0 : i32
    %c0_i32_1 = arith.constant 0 : i32
    return %c0_i32, %c0_i32_0 : i32, i32
  }
  func.func @transform_11(%arg0: i32, %arg1: i32) -> (i32, i32, i32) {
    %c0_i32 = arith.constant 0 : i32
    %c0_i32_0 = arith.constant 0 : i32
    return %arg0, %arg1, %c0_i32 : i32, i32, i32
  }
}

</mosaic_0001>

<llo_original>
// kernel: tpu_custom_call.1
$region0: #{tpu_custom_call.1}
  #allocation0 [shape = 'u32[]', space=smem, size = 0x4, offset = 0x4, fixed_abs, tag = 'smem constant byte address 0x4 - core index']
  #allocation1 [shape = 'u32[72,128]{1,0:T(1,128)}', space=vmem, size = 0x9000, scoped, tag = 'internal scratch']
  #allocation2 [shape = 'f32[18,128]{1,0:T(8,128)}', space=vmem, size = 0x3000, scoped, tag = 'scratch operand']
  %s0 = inlined_call_operand.hbm [shape: f32[2,64,128], index: 0, kind: input, shape index: {}]
  %s1 = inlined_call_operand.hbm [shape: f32[1,128], index: 1, kind: input, shape index: {}]
  %s2 = inlined_call_operand.hbm [shape: f32[1,128], index: 2, kind: input, shape index: {}]
  %s3 = inlined_call_operand.hbm [shape: bf16[128,256], index: 3, kind: input, shape index: {}]
  %s4 = inlined_call_operand.hbm [shape: f32[1,256], index: 4, kind: input, shape index: {}]
  %s5 = inlined_call_operand.vmem [shape: f32[3,128], index: 5, kind: input, shape index: {}]
  %s6 = inlined_call_operand.vmem [shape: f32[1,128], index: 6, kind: input, shape index: {}]
  %s7 = inlined_call_operand.vmem [shape: f32[1,128], index: 7, kind: input, shape index: {}]
  %s8 = inlined_call_operand.vmem [shape: f32[1,128], index: 8, kind: input, shape index: {}]
  %s9 = inlined_call_operand.hbm [shape: bf16[128,128], index: 9, kind: input, shape index: {}]
  %s10 = inlined_call_operand.vmem [shape: f32[1,128], index: 10, kind: input, shape index: {}]
  %s11 = inlined_call_operand.hbm [shape: f32[2,64,128], index: 11, kind: output, shape index: {}]
  %s12 = sld [smem:[#allocation0]]
  $region105: #{tpu_custom_call.1} parent=0
    _
  %s14 = ssub.s32 1, %s12
  %s15 = scalar_select 0, %s14, %s12
  $region1: #{tpu_custom_call.1} parent=0
    #allocation3 [shape = 'u8[16384]{0}', space=vmem, size = 0x4000, scoped, tag = 'input window, operand 0']
    #allocation4 [shape = 's32[2]{0}', space=sflag, size = 0x8, scoped, tag = 'scoped memory for tpu_custom_call.1']
    #allocation5 [shape = 's32[2]{0}', space=sflag, size = 0x8, scoped, tag = 'scoped memory for tpu_custom_call.1']
    #allocation6 [shape = 'u8[512]{0}', space=vmem, size = 0x400, scoped, tag = 'input window, operand 1, single buffered']
    #allocation7 [shape = 's32[1]{0}', space=sflag, size = 0x4, scoped, tag = 'scoped memory for tpu_custom_call.1']
    #allocation8 [shape = 'u8[512]{0}', space=vmem, size = 0x400, scoped, tag = 'input window, operand 2, single buffered']
    #allocation9 [shape = 'u8[65536]{0}', space=vmem, size = 0x10000, scoped, tag = 'input window, operand 3, single buffered']
    #allocation10 [shape = 's32[1]{0}', space=sflag, size = 0x4, scoped, tag = 'scoped memory for tpu_custom_call.1']
    #allocation11 [shape = 'u8[1024]{0}', space=vmem, size = 0x400, scoped, tag = 'input window, operand 4, single buffered']
    #allocation12 [shape = 'u8[32768]{0}', space=vmem, size = 0x8000, scoped, tag = 'input window, operand 9, single buffered']
    #allocation13 [shape = 's32[1]{0}', space=sflag, size = 0x4, scoped, tag = 'scoped memory for tpu_custom_call.1']
    #allocation14 [shape = 'u8[16384]{0}', space=vmem, size = 0x4000, scoped, tag = 'output window, operand 0']
    %16 = vsyncpa [#allocation4], 0
    %s17 = scalar_lea.sflag [#allocation4], 1
    %18 = vsyncpa %s17, 0
    %19 = vsyncpa [#allocation7], 0
    %20 = vsyncpa [#allocation10], 0
    %21 = vsyncpa [#allocation13], 0
    %22 = vsyncpa [#allocation5], 0
    %s23 = scalar_lea.sflag [#allocation5], 1
    %24 = vsyncpa %s23, 0
    loop: start=0, step=1, limit=10
    $region2: #{tpu_custom_call.1} parent=1 // loop_pre_header
      _
    $region3: #{tpu_custom_call.1} parent=1 // loop_header
      %s26 = sphi 0, %s30
      %p27 = scmp.ge.s32.totalorder %s26, 10
      %s33 = sphi 0, %s45
      %s34 = sphi 0, %s41
      %s35 = sphi 0, %s33
      %s36 = sphi 0, %s34
      %s37 = sphi 0, %s35
      %s38 = sphi 0, %s36
      %s50 = sphi 0, %s52
      %s53 = sphi 0, %s50
      %s54 = sphi 0, %s53
      %s70 = sphi 0, %s54
      %s74 = sphi 0, %s74
      %s76 = sphi 0, %s74
      %s77 = sphi 0, %s76
      %s91 = sphi 0, %s77
      %s95 = sphi 0, %s95
      %s97 = sphi 0, %s95
      %s98 = sphi 0, %s97
      %s112 = sphi 0, %s98
      %s116 = sphi 0, %s116
      %s118 = sphi 0, %s116
      %s119 = sphi 0, %s118
      %s133 = sphi 0, %s119
      %s137 = sphi 0, %s137
      %s139 = sphi 0, %s137
      %s140 = sphi 0, %s139
      %s154 = sphi 0, %s140
      %s158 = sphi 0, %s158
      %s160 = sphi 0, %s158
      %s161 = sphi 0, %s160
      %s175 = sphi 0, %s161
      %s179 = sphi 0, %s179
      %s181 = sphi 0, %s179
      %s182 = sphi 0, %s181
      %s196 = sphi 0, %s182
      %s200 = sphi 0, %s200
      %s202 = sphi 0, %s200
      %s203 = sphi 0, %s202
      %s217 = sphi 0, %s203
      %s221 = sphi 0, %s221
      %s223 = sphi 0, %s221
      %s224 = sphi 0, %s223
      %s238 = sphi 0, %s224
      %s242 = sphi 0, %s242
      %s244 = sphi 0, %s242
      %s245 = sphi 0, %s244
      %s259 = sphi 0, %s245
      %s263 = sphi 0, %s263
      %s265 = sphi 0, %s263
      %s266 = sphi 0, %s265
      %s280 = sphi 0, %s266
      %s288 = sphi 0, %s290
      %s291 = sphi 0, %s288
      %s292 = sphi 0, %s291
      %s308 = sphi 0, %s292
    $region4: #{tpu_custom_call.1} parent=1 // loop_header_branch
      %29 = sbr.rel (%p27) target = $region8
    $region5: #{tpu_custom_call.1} parent=1 // loop_body
      %s31 = ssub.s32 %s26, 1
      %s32 = ssub.s32 %s26, 2
      %s39 = sadd.s32 1, %s34
      %p40 = scmp.ge.s32.totalorder %s39, 4
      %s41 = scalar_select %p40, 0, %s39
      %s42 = sadd.s32 1, %s33
      %s43 = scalar_select %p40, %s42, %s33
      %p44 = scmp.ge.s32.totalorder %s43, 2
      %s45 = scalar_select %p44, 0, %s43
      %s46 = ssub.s32 %s33, %s45
      %s47 = ssub.s32 %s34, %s41
      %s48 = sor.u32 %s46, %s47
      %p49 = scmp.eq.s32.totalorder %s48, 0
      %s51 = sadd.s32 %s50, 1
      %s52 = scalar_select %p49, %s50, %s51
      %p55 = pneg %p49
      %p56 = scmp.eq.s32.totalorder %s26, 7
      %p57 = por %p55, %p56
      %p58 = scmp.ne.s32.totalorder %s50, %s53
      %p59 = scmp.eq.s32.totalorder %s26, 0
      %p60 = por %p58, %p59
      %p61 = scmp.ne.s32.totalorder %s50, %s53
      %p62 = scmp.eq.s32.totalorder %s31, 7
      %p63 = por %p61, %p62
      %p64 = scmp.ne.s32.totalorder %s53, %s54
      %p65 = scmp.eq.s32.totalorder %s31, 0
      %p66 = por %p64, %p65
      %p67 = scmp.ne.s32.totalorder %s53, %s54
      %p68 = scmp.eq.s32.totalorder %s32, 7
      %p69 = por %p67, %p68
      %p71 = scmp.ne.s32.totalorder %s54, %s70
      %p72 = scmp.eq.s32.totalorder %s32, 0
      %p73 = por %p71, %p72
      %s75 = sadd.s32 %s74, 1
      %p78 = scmp.eq.s32.totalorder %s26, 7
      %p79 = scmp.ne.s32.totalorder %s74, %s76
      %p80 = scmp.eq.s32.totalorder %s26, 0
      %p81 = por %p79, %p80
      %p82 = scmp.ne.s32.totalorder %s74, %s76
      %p83 = scmp.eq.s32.totalorder %s31, 7
      %p84 = por %p82, %p83
      %p85 = scmp.ne.s32.totalorder %s76, %s77
      %p86 = scmp.eq.s32.totalorder %s31, 0
      %p87 = por %p85, %p86
      %p88 = scmp.ne.s32.totalorder %s76, %s77
      %p89 = scmp.eq.s32.totalorder %s32, 7
      %p90 = por %p88, %p89
      %p92 = scmp.ne.s32.totalorder %s77, %s91
      %p93 = scmp.eq.s32.totalorder %s32, 0
      %p94 = por %p92, %p93
      %s96 = sadd.s32 %s95, 1
      %p99 = scmp.eq.s32.totalorder %s26, 7
      %p100 = scmp.ne.s32.totalorder %s95, %s97
      %p101 = scmp.eq.s32.totalorder %s26, 0
      %p102 = por %p100, %p101
      %p103 = scmp.ne.s32.totalorder %s95, %s97
      %p104 = scmp.eq.s32.totalorder %s31, 7
      %p105 = por %p103, %p104
      %p106 = scmp.ne.s32.totalorder %s97, %s98
      %p107 = scmp.eq.s32.totalorder %s31, 0
      %p108 = por %p106, %p107
      %p109 = scmp.ne.s32.totalorder %s97, %s98
      %p110 = scmp.eq.s32.totalorder %s32, 7
      %p111 = por %p109, %p110
      %p113 = scmp.ne.s32.totalorder %s98, %s112
      %p114 = scmp.eq.s32.totalorder %s32, 0
      %p115 = por %p113, %p114
      %s117 = sadd.s32 %s116, 1
      %p120 = scmp.eq.s32.totalorder %s26, 7
      %p121 = scmp.ne.s32.totalorder %s116, %s118
      %p122 = scmp.eq.s32.totalorder %s26, 0
      %p123 = por %p121, %p122
      %p124 = scmp.ne.s32.totalorder %s116, %s118
      %p125 = scmp.eq.s32.totalorder %s31, 7
      %p126 = por %p124, %p125
      %p127 = scmp.ne.s32.totalorder %s118, %s119
      %p128 = scmp.eq.s32.totalorder %s31, 0
      %p129 = por %p127, %p128
      %p130 = scmp.ne.s32.totalorder %s118, %s119
      %p131 = scmp.eq.s32.totalorder %s32, 7
      %p132 = por %p130, %p131
      %p134 = scmp.ne.s32.totalorder %s119, %s133
      %p135 = scmp.eq.s32.totalorder %s32, 0
      %p136 = por %p134, %p135
      %s138 = sadd.s32 %s137, 1
      %p141 = scmp.eq.s32.totalorder %s26, 7
      %p142 = scmp.ne.s32.totalorder %s137, %s139
      %p143 = scmp.eq.s32.totalorder %s26, 0
      %p144 = por %p142, %p143
      %p145 = scmp.ne.s32.totalorder %s137, %s139
      %p146 = scmp.eq.s32.totalorder %s31, 7
      %p147 = por %p145, %p146
      %p148 = scmp.ne.s32.totalorder %s139, %s140
      %p149 = scmp.eq.s32.totalorder %s31, 0
      %p150 = por %p148, %p149
      %p151 = scmp.ne.s32.totalorder %s139, %s140
      %p152 = scmp.eq.s32.totalorder %s32, 7
      %p153 = por %p151, %p152
      %p155 = scmp.ne.s32.totalorder %s140, %s154
      %p156 = scmp.eq.s32.totalorder %s32, 0
      %p157 = por %p155, %p156
      %s159 = sadd.s32 %s158, 1
      %p162 = scmp.eq.s32.totalorder %s26, 7
      %p163 = scmp.ne.s32.totalorder %s158, %s160
      %p164 = scmp.eq.s32.totalorder %s26, 0
      %p165 = por %p163, %p164
      %p166 = scmp.ne.s32.totalorder %s158, %s160
      %p167 = scmp.eq.s32.totalorder %s31, 7
      %p168 = por %p166, %p167
      %p169 = scmp.ne.s32.totalorder %s160, %s161
      %p170 = scmp.eq.s32.totalorder %s31, 0
      %p171 = por %p169, %p170
      %p172 = scmp.ne.s32.totalorder %s160, %s161
      %p173 = scmp.eq.s32.totalorder %s32, 7
      %p174 = por %p172, %p173
      %p176 = scmp.ne.s32.totalorder %s161, %s175
      %p177 = scmp.eq.s32.totalorder %s32, 0
      %p178 = por %p176, %p177
      %s180 = sadd.s32 %s179, 1
      %p183 = scmp.eq.s32.totalorder %s26, 7
      %p184 = scmp.ne.s32.totalorder %s179, %s181
      %p185 = scmp.eq.s32.totalorder %s26, 0
      %p186 = por %p184, %p185
      %p187 = scmp.ne.s32.totalorder %s179, %s181
      %p188 = scmp.eq.s32.totalorder %s31, 7
      %p189 = por %p187, %p188
      %p190 = scmp.ne.s32.totalorder %s181, %s182
      %p191 = scmp.eq.s32.totalorder %s31, 0
      %p192 = por %p190, %p191
      %p193 = scmp.ne.s32.totalorder %s181, %s182
      %p194 = scmp.eq.s32.totalorder %s32, 7
      %p195 = por %p193, %p194
      %p197 = scmp.ne.s32.totalorder %s182, %s196
      %p198 = scmp.eq.s32.totalorder %s32, 0
      %p199 = por %p197, %p198
      %s201 = sadd.s32 %s200, 1
      %p204 = scmp.eq.s32.totalorder %s26, 7
      %p205 = scmp.ne.s32.totalorder %s200, %s202
      %p206 = scmp.eq.s32.totalorder %s26, 0
      %p207 = por %p205, %p206
      %p208 = scmp.ne.s32.totalorder %s200, %s202
      %p209 = scmp.eq.s32.totalorder %s31, 7
      %p210 = por %p208, %p209
      %p211 = scmp.ne.s32.totalorder %s202, %s203
      %p212 = scmp.eq.s32.totalorder %s31, 0
      %p213 = por %p211, %p212
      %p214 = scmp.ne.s32.totalorder %s202, %s203
      %p215 = scmp.eq.s32.totalorder %s32, 7
      %p216 = por %p214, %p215
      %p218 = scmp.ne.s32.totalorder %s203, %s217
      %p219 = scmp.eq.s32.totalorder %s32, 0
      %p220 = por %p218, %p219
      %s222 = sadd.s32 %s221, 1
      %p225 = scmp.eq.s32.totalorder %s26, 7
      %p226 = scmp.ne.s32.totalorder %s221, %s223
      %p227 = scmp.eq.s32.totalorder %s26, 0
      %p228 = por %p226, %p227
      %p229 = scmp.ne.s32.totalorder %s221, %s223
      %p230 = scmp.eq.s32.totalorder %s31, 7
      %p231 = por %p229, %p230
      %p232 = scmp.ne.s32.totalorder %s223, %s224
      %p233 = scmp.eq.s32.totalorder %s31, 0
      %p234 = por %p232, %p233
      %p235 = scmp.ne.s32.totalorder %s223, %s224
      %p236 = scmp.eq.s32.totalorder %s32, 7
      %p237 = por %p235, %p236
      %p239 = scmp.ne.s32.totalorder %s224, %s238
      %p240 = scmp.eq.s32.totalorder %s32, 0
      %p241 = por %p239, %p240
      %s243 = sadd.s32 %s242, 1
      %p246 = scmp.eq.s32.totalorder %s26, 7
      %p247 = scmp.ne.s32.totalorder %s242, %s244
      %p248 = scmp.eq.s32.totalorder %s26, 0
      %p249 = por %p247, %p248
      %p250 = scmp.ne.s32.totalorder %s242, %s244
      %p251 = scmp.eq.s32.totalorder %s31, 7
      %p252 = por %p250, %p251
      %p253 = scmp.ne.s32.totalorder %s244, %s245
      %p254 = scmp.eq.s32.totalorder %s31, 0
      %p255 = por %p253, %p254
      %p256 = scmp.ne.s32.totalorder %s244, %s245
      %p257 = scmp.eq.s32.totalorder %s32, 7
      %p258 = por %p256, %p257
      %p260 = scmp.ne.s32.totalorder %s245, %s259
      %p261 = scmp.eq.s32.totalorder %s32, 0
      %p262 = por %p260, %p261
      %s264 = sadd.s32 %s263, 1
      %p267 = scmp.eq.s32.totalorder %s26, 7
      %p268 = scmp.ne.s32.totalorder %s263, %s265
      %p269 = scmp.eq.s32.totalorder %s26, 0
      %p270 = por %p268, %p269
      %p271 = scmp.ne.s32.totalorder %s263, %s265
      %p272 = scmp.eq.s32.totalorder %s31, 7
      %p273 = por %p271, %p272
      %p274 = scmp.ne.s32.totalorder %s265, %s266
      %p275 = scmp.eq.s32.totalorder %s31, 0
      %p276 = por %p274, %p275
      %p277 = scmp.ne.s32.totalorder %s265, %s266
      %p278 = scmp.eq.s32.totalorder %s32, 7
      %p279 = por %p277, %p278
      %p281 = scmp.ne.s32.totalorder %s266, %s280
      %p282 = scmp.eq.s32.totalorder %s32, 0
      %p283 = por %p281, %p282
      %s284 = ssub.s32 %s33, %s45
      %s285 = ssub.s32 %s34, %s41
      %s286 = sor.u32 %s284, %s285
      %p287 = scmp.eq.s32.totalorder %s286, 0
      %s289 = sadd.s32 %s288, 1
      %s290 = scalar_select %p287, %s288, %s289
      %p293 = pneg %p287
      %p294 = scmp.eq.s32.totalorder %s26, 7
      %p295 = por %p293, %p294
      %p296 = scmp.ne.s32.totalorder %s288, %s291
      %p297 = scmp.eq.s32.totalorder %s26, 0
      %p298 = por %p296, %p297
      %p299 = scmp.ne.s32.totalorder %s288, %s291
      %p300 = scmp.eq.s32.totalorder %s31, 7
      %p301 = por %p299, %p300
      %p302 = scmp.ne.s32.totalorder %s291, %s292
      %p303 = scmp.eq.s32.totalorder %s31, 0
      %p304 = por %p302, %p303
      %p305 = scmp.ne.s32.totalorder %s291, %s292
      %p306 = scmp.eq.s32.totalorder %s32, 7
      %p307 = por %p305, %p306
      %p309 = scmp.ne.s32.totalorder %s292, %s308
      %p310 = scmp.eq.s32.totalorder %s32, 0
      %p311 = por %p309, %p310
      %p312 = scmp.le.s32.totalorder 1, %s26
      %p313 = scmp.lt.s32.totalorder %s26, 9
      %p314 = pnand %p312, %p313
      %p315 = pneg %p314
      // Predicated region
      $region9: #{tpu_custom_call.1} parent=5 // pred_check
        _
      $region10: #{tpu_custom_call.1} parent=5 // pred_check_branch
        %317 = sbr.rel (%p314) target = $region12
      $region11: #{tpu_custom_call.1} parent=5 // pred_region
        %s318 = ssub.s32 %s26, 1
        // Predicated region
        $region13: #{tpu_custom_call.1} parent=11 // pred_check
          %p319 = pneg %p87
        $region14: #{tpu_custom_call.1} parent=11 // pred_check_branch
          %321 = sbr.rel (%p319) target = $region16
        $region15: #{tpu_custom_call.1} parent=11 // pred_region
          %323 = vsyncadd [#allocation7], 0
          %s325 = sshll.u32 %s1, 4
          %s326 = int_to_ptr.hbm [resolvable:$true] %s325
          %s327 = sshll.u32 [#allocation6], 4
          %s328 = int_to_ptr.vmem [resolvable:$true] %s327
          %330 = dma.hbm_to_vmem [thread:$0]  %s326, 16, %s328, [#allocation7]
        $region16: #{tpu_custom_call.1} parent=11 // pred_fallthru
          _
        // Predicated region
        $region17: #{tpu_custom_call.1} parent=11 // pred_check
          %p331 = pneg %p108
        $region18: #{tpu_custom_call.1} parent=11 // pred_check_branch
          %333 = sbr.rel (%p331) target = $region20
        $region19: #{tpu_custom_call.1} parent=11 // pred_region
          %335 = vsyncadd [#allocation7], 0
          %s337 = sshll.u32 %s2, 4
          %s338 = int_to_ptr.hbm [resolvable:$true] %s337
          %s339 = sshll.u32 [#allocation8], 4
          %s340 = int_to_ptr.vmem [resolvable:$true] %s339
          %342 = dma.hbm_to_vmem [thread:$0]  %s338, 16, %s340, [#allocation7]
        $region20: #{tpu_custom_call.1} parent=11 // pred_fallthru
          _
        // Predicated region
        $region21: #{tpu_custom_call.1} parent=11 // pred_check
          %p343 = pneg %p129
        $region22: #{tpu_custom_call.1} parent=11 // pred_check_branch
          %345 = sbr.rel (%p343) target = $region24
        $region23: #{tpu_custom_call.1} parent=11 // pred_region
          %347 = vsyncadd [#allocation10], 0
          %s348 = sshll.u32 %s3, 4
          %s349 = int_to_ptr.hbm [resolvable:$true] %s348
          %s350 = sshll.u32 [#allocation9], 4
          %s351 = int_to_ptr.vmem [resolvable:$true] %s350
          %356 = dma.hbm_to_vmem [thread:$0]  %s349, 2048, %s351, [#allocation10], 128, 128, 8
        $region24: #{tpu_custom_call.1} parent=11 // pred_fallthru
          _
        // Predicated region
        $region25: #{tpu_custom_call.1} parent=11 // pred_check
          %p357 = pneg %p150
        $region26: #{tpu_custom_call.1} parent=11 // pred_check_branch
          %359 = sbr.rel (%p357) target = $region28
        $region27: #{tpu_custom_call.1} parent=11 // pred_region
          %361 = vsyncadd [#allocation10], 0
          %s363 = sshll.u32 %s4, 4
          %s364 = int_to_ptr.hbm [resolvable:$true] %s363
          %s365 = sshll.u32 [#allocation11], 4
          %s366 = int_to_ptr.vmem [resolvable:$true] %s365
          %368 = dma.hbm_to_vmem [thread:$0]  %s364, 32, %s366, [#allocation10]
        $region28: #{tpu_custom_call.1} parent=11 // pred_fallthru
          _
        // Predicated region
        $region29: #{tpu_custom_call.1} parent=11 // pred_check
          %p369 = pneg %p171
        $region30: #{tpu_custom_call.1} parent=11 // pred_check_branch
          %371 = sbr.rel (%p369) target = $region32
        $region31: #{tpu_custom_call.1} parent=11 // pred_region
          _
        $region32: #{tpu_custom_call.1} parent=11 // pred_fallthru
          _
        // Predicated region
        $region33: #{tpu_custom_call.1} parent=11 // pred_check
          %p372 = pneg %p192
        $region34: #{tpu_custom_call.1} parent=11 // pred_check_branch
          %374 = sbr.rel (%p372) target = $region36
        $region35: #{tpu_custom_call.1} parent=11 // pred_region
          _
        $region36: #{tpu_custom_call.1} parent=11 // pred_fallthru
          _
        // Predicated region
        $region37: #{tpu_custom_call.1} parent=11 // pred_check
          %p375 = pneg %p213
        $region38: #{tpu_custom_call.1} parent=11 // pred_check_branch
          %377 = sbr.rel (%p375) target = $region40
        $region39: #{tpu_custom_call.1} parent=11 // pred_region
          _
        $region40: #{tpu_custom_call.1} parent=11 // pred_fallthru
          _
        // Predicated region
        $region41: #{tpu_custom_call.1} parent=11 // pred_check
          %p378 = pneg %p234
        $region42: #{tpu_custom_call.1} parent=11 // pred_check_branch
          %380 = sbr.rel (%p378) target = $region44
        $region43: #{tpu_custom_call.1} parent=11 // pred_region
          _
        $region44: #{tpu_custom_call.1} parent=11 // pred_fallthru
          _
        // Predicated region
        $region45: #{tpu_custom_call.1} parent=11 // pred_check
          %p381 = pneg %p255
        $region46: #{tpu_custom_call.1} parent=11 // pred_check_branch
          %383 = sbr.rel (%p381) target = $region48
        $region47: #{tpu_custom_call.1} parent=11 // pred_region
          %385 = vsyncadd [#allocation13], 0
          %s386 = sshll.u32 %s9, 4
          %s387 = int_to_ptr.hbm [resolvable:$true] %s386
          %s388 = sshll.u32 [#allocation12], 4
          %s389 = int_to_ptr.vmem [resolvable:$true] %s388
          %394 = dma.hbm_to_vmem [thread:$0]  %s387, 1024, %s389, [#allocation13], 64, 64, 4
        $region48: #{tpu_custom_call.1} parent=11 // pred_fallthru
          _
        // Predicated region
        $region49: #{tpu_custom_call.1} parent=11 // pred_check
          %p395 = pneg %p276
        $region50: #{tpu_custom_call.1} parent=11 // pred_check_branch
          %397 = sbr.rel (%p395) target = $region52
        $region51: #{tpu_custom_call.1} parent=11 // pred_region
          _
        $region52: #{tpu_custom_call.1} parent=11 // pred_fallthru
          _
      $region12: #{tpu_custom_call.1} parent=5 // pred_fallthru
        _
      %p398 = scmp.lt.s32.totalorder %s26, 8
      // Predicated region
      $region53: #{tpu_custom_call.1} parent=5 // pred_check
        %p399 = pneg %p398
      $region54: #{tpu_custom_call.1} parent=5 // pred_check_branch
        %401 = sbr.rel (%p399) target = $region56
      $region55: #{tpu_custom_call.1} parent=5 // pred_region
        // Predicated region
        $region57: #{tpu_custom_call.1} parent=55 // pred_check
          %p402 = pneg %p60
        $region58: #{tpu_custom_call.1} parent=55 // pred_check_branch
          %404 = sbr.rel (%p402) target = $region60
        $region59: #{tpu_custom_call.1} parent=55 // pred_region
          %s405 = sand.u32 %s50, 1
          %s406 = scalar_lea.sflag [#allocation4], %s405
          %s407 = sand.u32 %s50, 1
          %s408 = smul.addr %s407, 16
          %s409 = scalar_lea.vmem [#allocation3], %s408
          %s410 = smul.u32 2, %s34
          %412 = vsyncadd %s406, 0
          %s413 = smul.addr %s33, 8
          %s414 = sadd.s32 %s410, %s413
          %s415 = smul.addr %s414, 8
          %s416 = scalar_lea.hbm %s0, %s415
          %s417 = sshll.u32 %s416, 4
          %s418 = int_to_ptr.hbm [resolvable:$true] %s417
          %s419 = sshll.u32 %s409, 4
          %s420 = int_to_ptr.vmem [resolvable:$true] %s419
          %425 = dma.hbm_to_vmem [thread:$0]  %s418, 256, %s420, %s406, 128, 128, 8
        $region60: #{tpu_custom_call.1} parent=55 // pred_fallthru
          _
      $region56: #{tpu_custom_call.1} parent=5 // pred_fallthru
        _
      %p426 = scmp.le.s32.totalorder 1, %s26
      %p427 = scmp.lt.s32.totalorder %s26, 9
      %p428 = pnand %p426, %p427
      %p429 = pneg %p428
      // Predicated region
      $region61: #{tpu_custom_call.1} parent=5 // pred_check
        _
      $region62: #{tpu_custom_call.1} parent=5 // pred_check_branch
        %431 = sbr.rel (%p428) target = $region64
      $region63: #{tpu_custom_call.1} parent=5 // pred_region
        %s432 = ssub.s32 %s26, 1
        %s433 = sand.u32 %s53, 1
        %s434 = scalar_lea.sflag [#allocation4], %s433
        %s435 = sand.u32 %s53, 1
        %s436 = smul.addr %s435, 16
        %s437 = scalar_lea.vmem [#allocation3], %s436
        // Predicated region
        $region65: #{tpu_custom_call.1} parent=63 // pred_check
          %p438 = pneg %p66
        $region66: #{tpu_custom_call.1} parent=63 // pred_check_branch
          %440 = sbr.rel (%p438) target = $region68
        $region67: #{tpu_custom_call.1} parent=63 // pred_region
          %442 = dma.done %s434, 256
        $region68: #{tpu_custom_call.1} parent=63 // pred_fallthru
          _
        // Predicated region
        $region69: #{tpu_custom_call.1} parent=63 // pred_check
          %p443 = pneg %p87
        $region70: #{tpu_custom_call.1} parent=63 // pred_check_branch
          %445 = sbr.rel (%p443) target = $region72
        $region71: #{tpu_custom_call.1} parent=63 // pred_region
          %447 = dma.done [#allocation7], 16
        $region72: #{tpu_custom_call.1} parent=63 // pred_fallthru
          _
        // Predicated region
        $region73: #{tpu_custom_call.1} parent=63 // pred_check
          %p448 = pneg %p108
        $region74: #{tpu_custom_call.1} parent=63 // pred_check_branch
          %450 = sbr.rel (%p448) target = $region76
        $region75: #{tpu_custom_call.1} parent=63 // pred_region
          %452 = dma.done [#allocation7], 16
        $region76: #{tpu_custom_call.1} parent=63 // pred_fallthru
          _
        // Predicated region
        $region77: #{tpu_custom_call.1} parent=63 // pred_check
          %p453 = pneg %p129
        $region78: #{tpu_custom_call.1} parent=63 // pred_check_branch
          %455 = sbr.rel (%p453) target = $region80
        $region79: #{tpu_custom_call.1} parent=63 // pred_region
          %457 = dma.done [#allocation10], 2048
        $region80: #{tpu_custom_call.1} parent=63 // pred_fallthru
          _
        // Predicated region
        $region81: #{tpu_custom_call.1} parent=63 // pred_check
          %p458 = pneg %p150
        $region82: #{tpu_custom_call.1} parent=63 // pred_check_branch
          %460 = sbr.rel (%p458) target = $region84
        $region83: #{tpu_custom_call.1} parent=63 // pred_region
          %462 = dma.done [#allocation10], 32
        $region84: #{tpu_custom_call.1} parent=63 // pred_fallthru
          _
        // Predicated region
        $region85: #{tpu_custom_call.1} parent=63 // pred_check
          %p463 = pneg %p255
        $region86: #{tpu_custom_call.1} parent=63 // pred_check_branch
          %465 = sbr.rel (%p463) target = $region88
        $region87: #{tpu_custom_call.1} parent=63 // pred_region
          %467 = dma.done [#allocation13], 1024
        $region88: #{tpu_custom_call.1} parent=63 // pred_fallthru
          _
        %s468 = sand.u32 %s53, 1
        %s469 = scalar_lea.sflag [#allocation4], %s468
        %s470 = sand.u32 %s53, 1
        %s471 = smul.addr %s470, 16
        %s472 = scalar_lea.vmem [#allocation3], %s471
        %p473 = pneg %p66
        %p474 = pneg %p63
        %p475 = pneg %p87
        %p476 = pneg %p84
        %p477 = pneg %p108
        %p478 = pneg %p105
        %p479 = pneg %p129
        %p480 = pneg %p126
        %p481 = pneg %p150
        %p482 = pneg %p147
        %p483 = pneg %p171
        %p484 = pneg %p168
        %p485 = pneg %p192
        %p486 = pneg %p189
        %p487 = pneg %p213
        %p488 = pneg %p210
        %p489 = pneg %p234
        %p490 = pneg %p231
        %p491 = pneg %p255
        %p492 = pneg %p252
        %p493 = pneg %p276
        %p494 = pneg %p273
        %p495 = pneg %p304
        %p496 = pneg %p301
        %s497 = sand.u32 %s291, 1
        %s498 = scalar_lea.sflag [#allocation5], %s497
        %s499 = sand.u32 %s291, 1
        %s500 = smul.addr %s499, 16
        %s501 = scalar_lea.vmem [#allocation14], %s500
        %s502 = smul.u32 2, %s36
        %s503 = smul.u32 2, %s36
        %p504 = scmp.eq.s32.totalorder %s36, 0
        // Predicated region
        $region89: #{tpu_custom_call.1} parent=63 // pred_check
          %p505 = pneg %p504
        $region90: #{tpu_custom_call.1} parent=63 // pred_check_branch
          %507 = sbr.rel (%p505) target = $region92
        $region91: #{tpu_custom_call.1} parent=63 // pred_region
          %508 = vst [vmem:[#allocation2] sm:$0x3] 0.0
        $region92: #{tpu_custom_call.1} parent=63 // pred_fallthru
          _
        %v509 = vld [vmem:[%s437] sm:$0xff]
        %v510 = vld [vmem:[%s437 + $0x8] sm:$0xff]
        %v511 = vld [vmem:[#allocation6] sm:$0x1]
        %v512 = vld [vmem:[#allocation8] sm:$0x1]
        %513 = vadd.xlane.f32.xlu0 %v509
        %v514 = vpop.xlane.xlu0 %513
        %515 = vadd.xlane.f32.xlu0 %v510
        %v516 = vpop.xlane.xlu0 %515
        %v517 = vrcp.pop 128.0
        %v518 = vmul.f32 128.0, %v517
        %v519 = vsub.f32 1.0, %v518
        %v520 = vmul.f32 %v517, %v519
        %v521 = vadd.f32 %v517, %v520
        %vm522 = vweird.f32 %v517
        %v523 = vsel %vm522, %v517, %v521
        %v524 = vmul.f32 %v514, %v523
        %v525 = vmul.f32 %v516, %v523
        %v526 = vsub.f32 %v509, %v524
        %v527 = vsub.f32 %v510, %v525
        %v528 = vmul.f32 %v526, %v526
        %v529 = vmul.f32 %v527, %v527
        %530 = vadd.xlane.f32.xlu0 %v528
        %v531 = vpop.xlane.xlu0 %530
        %532 = vadd.xlane.f32.xlu0 %v529
        %v533 = vpop.xlane.xlu0 %532
        %v534 = vmul.f32 %v531, %v523
        %v535 = vmul.f32 %v533, %v523
        %v536 = vadd.f32 %v534, 1e-05
        %v537 = vadd.f32 %v535, 1e-05
        %v538 = vrsqrt.pop %v536
        %v539 = vmul.f32 %v538, %v536
        %v540 = vmul.f32 %v539, %v538
        %v541 = vmul.f32 0.5, %v540
        %v542 = vsub.f32 1.5, %v541
        %v543 = vmul.f32 %v538, %v542
        %vm544 = vweird.f32 %v536
        %vm545 = vweird.f32 %v538
        %vm546 = vmor %vm544, %vm545
        %v547 = vsel %vm546, %v538, %v543
        %v548 = vrsqrt.pop %v537
        %v549 = vmul.f32 %v548, %v537
        %v550 = vmul.f32 %v549, %v548
        %v551 = vmul.f32 0.5, %v550
        %v552 = vsub.f32 1.5, %v551
        %v553 = vmul.f32 %v548, %v552
        %vm554 = vweird.f32 %v537
        %vm555 = vweird.f32 %v548
        %vm556 = vmor %vm554, %vm555
        %v557 = vsel %vm556, %v548, %v553
        %v558 = vmul.f32 %v526, %v547
        %v559 = vmul.f32 %v527, %v557
        %v561 = vperm.slane %v511, 0
        %v563 = vmul.f32 %v558, %v561
        %v564 = vmul.f32 %v559, %v561
        %v566 = vperm.slane %v512, 0
        %v568 = vadd.f32 %v563, %v566
        %v569 = vadd.f32 %v564, %v566
        %v570 = vpack.c.bf16 %v569, %v568
        %v571 = vld [vmem:[#allocation9] sm:$0xff]
        %v572 = vld [vmem:[#allocation9 + $0x8] sm:$0xff]
        %v573 = vld [vmem:[#allocation9 + $0x10] sm:$0xff]
        %v574 = vld [vmem:[#allocation9 + $0x18] sm:$0xff]
        %v575 = vld [vmem:[#allocation9 + $0x20] sm:$0xff]
        %v576 = vld [vmem:[#allocation9 + $0x28] sm:$0xff]
        %v577 = vld [vmem:[#allocation9 + $0x30] sm:$0xff]
        %v578 = vld [vmem:[#allocation9 + $0x38] sm:$0xff]
        %v579 = vld [vmem:[#allocation9 + $0x40] sm:$0xff]
        %v580 = vld [vmem:[#allocation9 + $0x48] sm:$0xff]
        %v581 = vld [vmem:[#allocation9 + $0x50] sm:$0xff]
        %v582 = vld [vmem:[#allocation9 + $0x58] sm:$0xff]
        %v583 = vld [vmem:[#allocation9 + $0x60] sm:$0xff]
        %v584 = vld [vmem:[#allocation9 + $0x68] sm:$0xff]
        %v585 = vld [vmem:[#allocation9 + $0x70] sm:$0xff]
        %v586 = vld [vmem:[#allocation9 + $0x78] sm:$0xff]
        %v587 = vld [vmem:[#allocation11] sm:$0x3]
        %v589 = vperm.slane %v587, 0
        %v590 = vperm.slane %v587, 1
        %v609 = vunpack.c.l.b16 %v571
        %v610 = vunpack.c.h.b16 %v571
        %v611 = vunpack.c.l.b16 %v572
        %v612 = vunpack.c.h.b16 %v572
        %v613 = vunpack.c.l.b16 %v573
        %v614 = vunpack.c.h.b16 %v573
        %v615 = vunpack.c.l.b16 %v574
        %v616 = vunpack.c.h.b16 %v574
        %v617 = vunpack.c.l.b16 %v575
        %v618 = vunpack.c.h.b16 %v575
        %v619 = vunpack.c.l.b16 %v576
        %v620 = vunpack.c.h.b16 %v576
        %v621 = vunpack.c.l.b16 %v577
        %v622 = vunpack.c.h.b16 %v577
        %v623 = vunpack.c.l.b16 %v578
        %v624 = vunpack.c.h.b16 %v578
        %v625 = vunpack.c.l.b16 %v579
        %v626 = vunpack.c.h.b16 %v579
        %v627 = vunpack.c.l.b16 %v580
        %v628 = vunpack.c.h.b16 %v580
        %v629 = vunpack.c.l.b16 %v581
        %v630 = vunpack.c.h.b16 %v581
        %v631 = vunpack.c.l.b16 %v582
        %v632 = vunpack.c.h.b16 %v582
        %v633 = vunpack.c.l.b16 %v583
        %v634 = vunpack.c.h.b16 %v583
        %v635 = vunpack.c.l.b16 %v584
        %v636 = vunpack.c.h.b16 %v584
        %v637 = vunpack.c.l.b16 %v585
        %v638 = vunpack.c.h.b16 %v585
        %v639 = vunpack.c.l.b16 %v586
        %v640 = vunpack.c.h.b16 %v586
        %v641 = vpack.c.b16 %v611, %v609
        %v642 = vpack.c.b16 %v612, %v610
        %v643 = vpack.c.b16 %v615, %v613
        %v644 = vpack.c.b16 %v616, %v614
        %v645 = vpack.c.b16 %v619, %v617
        %v646 = vpack.c.b16 %v620, %v618
        %v647 = vpack.c.b16 %v623, %v621
        %v648 = vpack.c.b16 %v624, %v622
        %v649 = vpack.c.b16 %v627, %v625
        %v650 = vpack.c.b16 %v628, %v626
        %v651 = vpack.c.b16 %v631, %v629
        %v652 = vpack.c.b16 %v632, %v630
        %v653 = vpack.c.b16 %v635, %v633
        %v654 = vpack.c.b16 %v636, %v634
        %v655 = vpack.c.b16 %v639, %v637
        %v656 = vpack.c.b16 %v640, %v638
        %673 = vmatpush.bf16.msra.mxu0 %v655
        %674 = vmatpush.bf16.msra.mxu0 %v653
        %675 = vmatpush.bf16.msra.mxu0 %v651
        %676 = vmatpush.bf16.msra.mxu0 %v649
        %677 = vmatpush.bf16.msra.mxu0 %v647
        %678 = vmatpush.bf16.msra.mxu0 %v645
        %679 = vmatpush.bf16.msra.mxu0 %v643
        %680 = vmatpush.bf16.msra.mxu0 %v641
        %681 = vmatmul.bf16.gmra.mxu0 %v570
        %v682 = vpop.f32.mrf.mxu0
        %v683 = vadd.f32 %v589, %v682
        %v684 = vpop.f32.mrf.mxu0
        %v685 = vadd.f32 %v589, %v684
        %686 = vdwg.mxu0
        %687 = vmatpush.bf16.msra.mxu0 %v656
        %688 = vmatpush.bf16.msra.mxu0 %v654
        %689 = vmatpush.bf16.msra.mxu0 %v652
        %690 = vmatpush.bf16.msra.mxu0 %v650
        %691 = vmatpush.bf16.msra.mxu0 %v648
        %692 = vmatpush.bf16.msra.mxu0 %v646
        %693 = vmatpush.bf16.msra.mxu0 %v644
        %694 = vmatpush.bf16.msra.mxu0 %v642
        %695 = vmatmul.bf16.gmra.mxu0 %v570
        %v696 = vpop.f32.mrf.mxu0
        %v697 = vadd.f32 %v590, %v696
        %v698 = vpop.f32.mrf.mxu0
        %v699 = vadd.f32 %v590, %v698
        %700 = vdwg.mxu0
        %v701 = vxor.u32 %v697, 2147483648
        %v702 = vxor.u32 %v699, 2147483648
        %v703 = vmul.f32 %v701, 1.442695
        %v704 = vpow.pop %v703
        %v705 = vmul.f32 %v702, 1.442695
        %v706 = vpow.pop %v705
        %v707 = vadd.f32 %v704, 1.0
        %v708 = vadd.f32 %v706, 1.0
        %v709 = vrcp.pop %v707
        %v710 = vmul.f32 %v707, %v709
        %v711 = vsub.f32 1.0, %v710
        %v712 = vmul.f32 %v709, %v711
        %v713 = vadd.f32 %v709, %v712
        %vm714 = vweird.f32 %v707
        %vm715 = vweird.f32 %v709
        %vm716 = vmor %vm714, %vm715
        %v717 = vsel %vm716, %v709, %v713
        %v718 = vand.u32 2147483647, %v707
        %vm719 = vcmp.eq.f32.partialorder %v718, 8.507059e+37
        %v720 = vand.u32 %v707, 2147483648
        %v721 = vor.u32 1.1754944e-38, %v720
        %v722 = vsel %vm719, %v721, %v717
        %v723 = vmul.f32 1.0, %v722
        %v724 = vrcp.pop %v708
        %v725 = vmul.f32 %v708, %v724
        %v726 = vsub.f32 1.0, %v725
        %v727 = vmul.f32 %v724, %v726
        %v728 = vadd.f32 %v724, %v727
        %vm729 = vweird.f32 %v708
        %vm730 = vweird.f32 %v724
        %vm731 = vmor %vm729, %vm730
        %v732 = vsel %vm731, %v724, %v728
        %v733 = vand.u32 2147483647, %v708
        %vm734 = vcmp.eq.f32.partialorder %v733, 8.507059e+37
        %v735 = vand.u32 %v708, 2147483648
        %v736 = vor.u32 1.1754944e-38, %v735
        %v737 = vsel %vm734, %v736, %v732
        %v738 = vmul.f32 1.0, %v737
        %v739 = vmul.f32 %v683, %v723
        %v740 = vmul.f32 %v685, %v738
        %741 = vst [vmem:[#allocation2 + $0x2] sm:$0xff] %v739
        %742 = vst [vmem:[#allocation2 + $0xa] sm:$0xff] %v740
        %v743 = vld [vmem:[%s5] sm:$0x7]
        %v744 = vld [vmem:[#allocation2] sm:$0xff]
        %v745 = vld [vmem:[#allocation2 + $0x8] sm:$0xff]
        %v746 = vperm.slane %v743, 0
        %v747 = vmul.f32 %v744, %v746
        %v748 = vmul.f32 %v745, %v746
        %v749 = vld [vmem:[%s6] sm:$0x1]
        %v751 = vperm.slane %v749, 0
        %v753 = vadd.f32 %v747, %v751
        %v754 = vadd.f32 %v748, %v751
        %v755 = vld [vmem:[#allocation2 + $0x1] sm:$0xff]
        %v756 = vld [vmem:[#allocation2 + $0x9] sm:$0xff]
        %v757 = vperm.slane %v743, 1
        %v758 = vmul.f32 %v755, %v757
        %v759 = vmul.f32 %v756, %v757
        %v760 = vadd.f32 %v753, %v758
        %v761 = vadd.f32 %v754, %v759
        %v762 = vld [vmem:[#allocation2 + $0x2] sm:$0xff]
        %v763 = vld [vmem:[#allocation2 + $0xa] sm:$0xff]
        %v764 = vperm.slane %v743, 2
        %v765 = vmul.f32 %v762, %v764
        %v766 = vmul.f32 %v763, %v764
        %v767 = vadd.f32 %v760, %v765
        %v768 = vadd.f32 %v761, %v766
        %769 = vst [vmem:[#allocation2 - $0x6] sm:$0xc0] %v740
        %v770 = vld [vmem:[%s7] sm:$0x1]
        %v771 = vld [vmem:[%s8] sm:$0x1]
        %772 = vadd.xlane.f32.xlu0 %v767
        %v773 = vpop.xlane.xlu0 %772
        %774 = vadd.xlane.f32.xlu0 %v768
        %v775 = vpop.xlane.xlu0 %774
        %v776 = vmul.f32 %v773, %v523
        %v777 = vmul.f32 %v775, %v523
        %v778 = vsub.f32 %v767, %v776
        %v779 = vsub.f32 %v768, %v777
        %v780 = vmul.f32 %v778, %v778
        %v781 = vmul.f32 %v779, %v779
        %782 = vadd.xlane.f32.xlu0 %v780
        %v783 = vpop.xlane.xlu0 %782
        %784 = vadd.xlane.f32.xlu0 %v781
        %v785 = vpop.xlane.xlu0 %784
        %v786 = vmul.f32 %v783, %v523
        %v787 = vmul.f32 %v785, %v523
        %v788 = vadd.f32 %v786, 1e-05
        %v789 = vadd.f32 %v787, 1e-05
        %v790 = vrsqrt.pop %v788
        %v791 = vmul.f32 %v790, %v788
        %v792 = vmul.f32 %v791, %v790
        %v793 = vmul.f32 0.5, %v792
        %v794 = vsub.f32 1.5, %v793
        %v795 = vmul.f32 %v790, %v794
        %vm796 = vweird.f32 %v788
        %vm797 = vweird.f32 %v790
        %vm798 = vmor %vm796, %vm797
        %v799 = vsel %vm798, %v790, %v795
        %v800 = vrsqrt.pop %v789
        %v801 = vmul.f32 %v800, %v789
        %v802 = vmul.f32 %v801, %v800
        %v803 = vmul.f32 0.5, %v802
        %v804 = vsub.f32 1.5, %v803
        %v805 = vmul.f32 %v800, %v804
        %vm806 = vweird.f32 %v789
        %vm807 = vweird.f32 %v800
        %vm808 = vmor %vm806, %vm807
        %v809 = vsel %vm808, %v800, %v805
        %v810 = vmul.f32 %v778, %v799
        %v811 = vmul.f32 %v779, %v809
        %v813 = vperm.slane %v770, 0
        %v815 = vmul.f32 %v810, %v813
        %v816 = vmul.f32 %v811, %v813
        %v818 = vperm.slane %v771, 0
        %v820 = vadd.f32 %v815, %v818
        %v821 = vadd.f32 %v816, %v818
        %v822 = vxor.u32 %v820, 2147483648
        %v823 = vxor.u32 %v821, 2147483648
        %v824 = vmul.f32 %v822, 1.442695
        %v825 = vpow.pop %v824
        %v826 = vmul.f32 %v823, 1.442695
        %v827 = vpow.pop %v826
        %v828 = vadd.f32 %v825, 1.0
        %v829 = vadd.f32 %v827, 1.0
        %v830 = vrcp.pop %v828
        %v831 = vmul.f32 %v828, %v830
        %v832 = vsub.f32 1.0, %v831
        %v833 = vmul.f32 %v830, %v832
        %v834 = vadd.f32 %v830, %v833
        %vm835 = vweird.f32 %v828
        %vm836 = vweird.f32 %v830
        %vm837 = vmor %vm835, %vm836
        %v838 = vsel %vm837, %v830, %v834
        %v839 = vand.u32 2147483647, %v828
        %vm840 = vcmp.eq.f32.partialorder %v839, 8.507059e+37
        %v841 = vand.u32 %v828, 2147483648
        %v842 = vor.u32 1.1754944e-38, %v841
        %v843 = vsel %vm840, %v842, %v838
        %v844 = vmul.f32 1.0, %v843
        %v845 = vrcp.pop %v829
        %v846 = vmul.f32 %v829, %v845
        %v847 = vsub.f32 1.0, %v846
        %v848 = vmul.f32 %v845, %v847
        %v849 = vadd.f32 %v845, %v848
        %vm850 = vweird.f32 %v829
        %vm851 = vweird.f32 %v845
        %vm852 = vmor %vm850, %vm851
        %v853 = vsel %vm852, %v845, %v849
        %v854 = vand.u32 2147483647, %v829
        %vm855 = vcmp.eq.f32.partialorder %v854, 8.507059e+37
        %v856 = vand.u32 %v829, 2147483648
        %v857 = vor.u32 1.1754944e-38, %v856
        %v858 = vsel %vm855, %v857, %v853
        %v859 = vmul.f32 1.0, %v858
        %v860 = vmul.f32 %v820, %v844
        %v861 = vmul.f32 %v821, %v859
        %v862 = vpack.c.bf16 %v861, %v860
        %v863 = vld [vmem:[#allocation12] sm:$0xf]
        %v864 = vld [vmem:[#allocation12 + $0x4] sm:$0xf]
        %v865 = vld [vmem:[#allocation12 + $0x8] sm:$0xf]
        %v866 = vld [vmem:[#allocation12 + $0xc] sm:$0xf]
        %v867 = vld [vmem:[#allocation12 + $0x10] sm:$0xf]
        %v868 = vld [vmem:[#allocation12 + $0x14] sm:$0xf]
        %v869 = vld [vmem:[#allocation12 + $0x18] sm:$0xf]
        %v870 = vld [vmem:[#allocation12 + $0x1c] sm:$0xf]
        %v871 = vld [vmem:[#allocation12 + $0x20] sm:$0xf]
        %v872 = vld [vmem:[#allocation12 + $0x24] sm:$0xf]
        %v873 = vld [vmem:[#allocation12 + $0x28] sm:$0xf]
        %v874 = vld [vmem:[#allocation12 + $0x2c] sm:$0xf]
        %v875 = vld [vmem:[#allocation12 + $0x30] sm:$0xf]
        %v876 = vld [vmem:[#allocation12 + $0x34] sm:$0xf]
        %v877 = vld [vmem:[#allocation12 + $0x38] sm:$0xf]
        %v878 = vld [vmem:[#allocation12 + $0x3c] sm:$0xf]
        %v879 = vld [vmem:[%s10] sm:$0x1]
        %v881 = vperm.slane %v879, 0
        %v899 = vunpack.c.l.b16 %v863
        %v900 = vunpack.c.l.b16 %v864
        %v901 = vunpack.c.l.b16 %v865
        %v902 = vunpack.c.l.b16 %v866
        %v903 = vunpack.c.l.b16 %v867
        %v904 = vunpack.c.l.b16 %v868
        %v905 = vunpack.c.l.b16 %v869
        %v906 = vunpack.c.l.b16 %v870
        %v907 = vunpack.c.l.b16 %v871
        %v908 = vunpack.c.l.b16 %v872
        %v909 = vunpack.c.l.b16 %v873
        %v910 = vunpack.c.l.b16 %v874
        %v911 = vunpack.c.l.b16 %v875
        %v912 = vunpack.c.l.b16 %v876
        %v913 = vunpack.c.l.b16 %v877
        %v914 = vunpack.c.l.b16 %v878
        %v915 = vpack.c.b16 %v900, %v899
        %v916 = vpack.c.b16 %v902, %v901
        %v917 = vpack.c.b16 %v904, %v903
        %v918 = vpack.c.b16 %v906, %v905
        %v919 = vpack.c.b16 %v908, %v907
        %v920 = vpack.c.b16 %v910, %v909
        %v921 = vpack.c.b16 %v912, %v911
        %v922 = vpack.c.b16 %v914, %v913
        %931 = vmatpush.bf16.msra.mxu0 %v922
        %932 = vmatpush.bf16.msra.mxu0 %v921
        %933 = vmatpush.bf16.msra.mxu0 %v920
        %934 = vmatpush.bf16.msra.mxu0 %v919
        %935 = vmatpush.bf16.msra.mxu0 %v918
        %936 = vmatpush.bf16.msra.mxu0 %v917
        %937 = vmatpush.bf16.msra.mxu0 %v916
        %938 = vmatpush.bf16.msra.mxu0 %v915
        %939 = vmatmul.bf16.gmra.mxu0 %v862
        %v940 = vpop.f32.mrf.mxu0
        %v941 = vadd.f32 %v881, %v940
        %v942 = vpop.f32.mrf.mxu0
        %v943 = vadd.f32 %v881, %v942
        %944 = vdwg.mxu0
        %v945 = vadd.f32 %v941, %v509
        %v946 = vadd.f32 %v943, %v510
        %947 = vst [vmem:[%s501] sm:$0xff] %v945
        %948 = vst [vmem:[%s501 + $0x8] sm:$0xff] %v946
        %s949 = sand.u32 %s291, 1
        %s950 = scalar_lea.sflag [#allocation5], %s949
        %s951 = sand.u32 %s291, 1
        %s952 = smul.addr %s951, 16
        %s953 = scalar_lea.vmem [#allocation14], %s952
        // Predicated region
        $region93: #{tpu_custom_call.1} parent=63 // pred_check
          %p954 = pneg %p301
        $region94: #{tpu_custom_call.1} parent=63 // pred_check_branch
          %956 = sbr.rel (%p954) target = $region96
        $region95: #{tpu_custom_call.1} parent=63 // pred_region
          %s957 = smul.u32 2, %s36
          %959 = vsyncadd %s950, 0
          %s960 = smul.addr %s35, 8
          %s961 = sadd.s32 %s957, %s960
          %s962 = smul.addr %s961, 8
          %s963 = scalar_lea.hbm %s11, %s962
          %s964 = sshll.u32 %s953, 4
          %s965 = int_to_ptr.vmem [resolvable:$true] %s964
          %s966 = sshll.u32 %s963, 4
          %s967 = int_to_ptr.hbm [resolvable:$true] %s966
          %972 = dma.vmem_to_hbm [thread:$0]  %s965, 256, %s967, %s950, 128, 128, 8
        $region96: #{tpu_custom_call.1} parent=63 // pred_fallthru
          _
      $region64: #{tpu_custom_call.1} parent=5 // pred_fallthru
        _
      %p973 = scmp.le.s32.totalorder 2, %s26
      // Predicated region
      $region97: #{tpu_custom_call.1} parent=5 // pred_check
        %p974 = pneg %p973
      $region98: #{tpu_custom_call.1} parent=5 // pred_check_branch
        %976 = sbr.rel (%p974) target = $region100
      $region99: #{tpu_custom_call.1} parent=5 // pred_region
        %s977 = ssub.s32 %s26, 2
        // Predicated region
        $region101: #{tpu_custom_call.1} parent=99 // pred_check
          %p978 = pneg %p307
        $region102: #{tpu_custom_call.1} parent=99 // pred_check_branch
          %980 = sbr.rel (%p978) target = $region104
        $region103: #{tpu_custom_call.1} parent=99 // pred_region
          %s981 = sand.u32 %s292, 1
          %s982 = scalar_lea.sflag [#allocation5], %s981
          %s983 = sand.u32 %s292, 1
          %s984 = smul.addr %s983, 16
          %s985 = scalar_lea.vmem [#allocation14], %s984
          %987 = dma.done %s982, 256
        $region104: #{tpu_custom_call.1} parent=99 // pred_fallthru
          _
      $region100: #{tpu_custom_call.1} parent=5 // pred_fallthru
        _
    $region6: #{tpu_custom_call.1} parent=1 // loop_footer
      %s30 = sadd.s32 1, %s26
    $region7: #{tpu_custom_call.1} parent=1 // loop_footer_branch
      %25 = sbr.rel target = $region3
    $region8: #{tpu_custom_call.1} parent=1 // loop_exit
      _
    %988 = vsyncpa [#allocation4], 1
    %s989 = scalar_lea.sflag [#allocation4], 1
    %990 = vsyncpa %s989, 1
    %991 = vsyncpa [#allocation7], 1
    %992 = vsyncpa [#allocation10], 1
    %993 = vsyncpa [#allocation13], 1
    %994 = vsyncpa [#allocation5], 1
    %s995 = scalar_lea.sflag [#allocation5], 1
    %996 = vsyncpa %s995, 1

</llo_original>
